<compile_context>
chip_gen: v7x
topology: tpu7x:2x2x1
jax: 0.10.0
libtpu: 0.0.40
codegen_flags: <defaults>
</compile_context>

<pallas_src>
import numpy as np
import jax
import jax.numpy as jnp
from jax import lax
from jax.experimental import pallas as pl
from jax.experimental.pallas import tpu as pltpu


# -----------------------------------------------------------------------------
# Stillinger-Weber parameters (exact values from StillingerWeberLayer.__init__)
# -----------------------------------------------------------------------------
A_PARAM      = [3.9781804791, 11.3797414404, 1.1907355764]
B_PARAM      = [0.4446021306, 0.5266688197, 0.9015152673]
P_PARAM      = [5.0, 5.0, 5.0]          # constant -> folded into the kernel (x^5)
Q_PARAM      = [0.0, 0.0, 0.0]          # constant -> folded into the kernel (x^0 = 1)
SIGMA_PARAM  = [2.85295, 2.17517, 2.84133]
GAMMA_PARAM  = [1.3566322033, 1.3566322033, 1.3566322033]
CUTOFF_PARAM = [5.5466, 4.02692, 4.51956]
LAM_PARAM    = [7.4767529158, 8.159518122]
COSB0_PARAM  = [0.1428569579923222, 0.1428569579923222]
CUTJK_PARAM  = [3.86095, 5.5466]

# packed parameter vector layout (indices into the SMEM params array)
#  0: 2 A | 3: 5 B | 6: 8 p (unused) | 9:11 q (unused) | 12:14 sigma | 15:17 gamma
# 18:20 cutoff | 21:22 lam | 23:24 cos_beta0 | 25:26 cutoff_jk
PARAMS_PACKED = np.array(
    A_PARAM + B_PARAM + P_PARAM + Q_PARAM + SIGMA_PARAM + GAMMA_PARAM
    + CUTOFF_PARAM + LAM_PARAM + COSB0_PARAM + CUTJK_PARAM,
    dtype=np.float32,
)

MAX_TILE_M = 512      # centers per grid step (lane axis; multiple of 128)
FAR_SENTINEL = 1.0e4  # padded neighbor slots sit this far away -> fail every cutoff


# -----------------------------------------------------------------------------
# Pallas kernel: one tile of TILE_M centers, all neighbor slots
# -----------------------------------------------------------------------------
def sw_energy_kernel(params_ref, cn_ref, ci_ref, mask_ref, en_ref, ei_ref, out_ref):
    # ---- dense neighbor data -------------------------------------------------
    cnx = cn_ref[0]          # (Nm, T)
    cny = cn_ref[1]
    cnz = cn_ref[2]
    cix = ci_ref[0]          # (1, T)
    ciy = ci_ref[1]
    ciz = ci_ref[2]

    msk = mask_ref[...]      # (Nm, T)
    en = en_ref[...]         # (Nm, T)
    ei = ei_ref[...]         # (1, T)

    # i -> j displacement / squared distance
    dx = cnx - cix
    dy = cny - ciy
    dz = cnz - ciz
    r2 = dx * dx + dy * dy + dz * dz                       # (Nm, T)

    # sqrt/divide off the VALU: EUP rsqrt + approx reciprocal
    inv_r = lax.rsqrt(jnp.maximum(r2, 1e-12))              # sentinel keeps r2 >> 0
    rij = r2 * inv_r

    # ---- species one-hot weights for (i, j) pair parameters (computed once) --
    s = ei + en                                            # (Nm, T) in {0,1,2}
    w0 = (s < 0.5).astype(jnp.float32)
    w2 = (s > 1.5).astype(jnp.float32)
    w1 = 1.0 - w0 - w2

    def sel3(base):
        return (w0 * params_ref[base]
                + w1 * params_ref[base + 1]
                + w2 * params_ref[base + 2])

    A_ = sel3(0)
    B_ = sel3(3)
    sig_ = sel3(12)
    gam_ = sel3(15)
    cut_ = sel3(18)

    # Clamped denominator: always <= -1e-6, so exp(sigma/den) / exp(gamma/den)
    # underflow to exactly 0 beyond the cutoff and for padded sentinel slots.
    den = jnp.minimum(rij - cut_, -1e-6)                   # (Nm, T)
    inv_den = pl.reciprocal(den, approx=True)              # EUP, feeds an exp

    # ---- two-body term: p = 5, q = 0 -> three multiplies, one exp ------------
    sig_r = sig_ * inv_r
    sr2 = sig_r * sig_r
    sr5 = sr2 * sr2 * sig_r
    e2 = A_ * (B_ * sr5 - 1.0) * jnp.exp(sig_ * inv_den)   # (Nm, T), 0 past cutoff

    # ---- three-body per-neighbor factors -------------------------------------
    # valid triplets have e_j == e_k, so ijk = 2 - (e_i + 2*e_j)
    sel_ijk0 = (ei + 2.0 * en) > 1.5                       # (Nm, T)
    lam2d = jnp.where(sel_ijk0, params_ref[21], params_ref[22])
    cjk2d = jnp.where(sel_ijk0, params_ref[25], params_ref[26])
    cjk_sq = cjk2d * cjk2d
    cb0 = params_ref[23]        # cos_beta0[0] == cos_beta0[1] in this model

    # Fold padding + binary-species rule into the per-neighbor exp factor:
    # (e_i != e_j) & (e_j == e_k)  <=>  (e_i != e_j) & (e_i != e_k)  for species in {0,1}.
    valid_j = (msk > 0.5) & (en != ei)                     # (Nm, T)
    expg = jnp.where(valid_j, jnp.exp(gam_ * inv_den), 0.0)  # (Nm, T), 1 exp per slot
    wj = lam2d * expg                                      # (Nm, T) per-j weight

    # ---- three-body term: symmetric (j,k) sum via an unrolled j-slot loop ----
    # sum_{k>j} = 0.5 * (sum_{j,k} - sum_{j==k}); all j/k-indexed parameters are
    # equal whenever expg[j]*expg[k] != 0, so the integrand is symmetric.
    nm, tw = r2.shape
    acc = jnp.zeros((1, tw), jnp.float32)                  # per-center partial sum
    for j in range(nm):                                    # Nm is small (8-16)
        dxj = dx[j:j + 1, :]
        dyj = dy[j:j + 1, :]
        dzj = dz[j:j + 1, :]
        dot_j = dx * dxj + dy * dyj + dz * dzj             # (Nm, T)  (i->k).(i->j)
        rjk_sq = (r2 + r2[j:j + 1, :]) - 2.0 * dot_j       # |xk - xj|^2 (law of cosines)
        cosb = dot_j * (inv_r * inv_r[j:j + 1, :])
        cdiff = cosb - cb0
        contrib = jnp.where(rjk_sq <= cjk_sq[j:j + 1, :], expg * (cdiff * cdiff), 0.0)
        # sublane (k) reduction on the idle XLU, then a (1, T) accumulate
        acc = acc + wj[j:j + 1, :] * jnp.sum(contrib, axis=0, keepdims=True)

    # diagonal (j == k): cos_beta == 1, r_jk == 0 (always inside cutoff_jk)
    cdiff0 = 1.0 - cb0
    diag = wj * expg * (cdiff0 * cdiff0)                   # (Nm, T)
    e3_per_center = 0.5 * (acc - jnp.sum(diag, axis=0, keepdims=True))

    # per-center partial energies; the final scalar reduce happens outside
    out_ref[...] = 0.5 * jnp.sum(e2, axis=0, keepdims=True) + e3_per_center


def _pick_tile(m_pad, max_tile=MAX_TILE_M):
    """Largest 128-multiple tile <= max_tile dividing m_pad, preferring >= 2 tiles
    so the 'parallel' grid axis shards across both v7x TensorCores."""
    divisors = [t for t in range(128, min(max_tile, m_pad) + 1, 128) if m_pad % t == 0]
    multi = [t for t in divisors if m_pad // t >= 2]
    return max(multi) if multi else max(divisors)


def sw_energy_pallas(params, coords_n, coords_i, mask, elem_n, elem_i,
                     max_tile=MAX_TILE_M):
    _, nm_pad, m_pad = coords_n.shape
    assert nm_pad % 8 == 0, "neighbor axis must be padded to a multiple of 8"
    assert m_pad % 128 == 0, "center axis must be padded to a multiple of 128"
    tile_m = _pick_tile(m_pad, max_tile)
    num_tiles = m_pad // tile_m

    out = pl.pallas_call(
        sw_energy_kernel,
        out_shape=jax.ShapeDtypeStruct((1, m_pad), jnp.float32),
        grid=(num_tiles,),
        in_specs=[
            pl.BlockSpec(memory_space=pltpu.MemorySpace.SMEM),            # params
            pl.BlockSpec((3, nm_pad, tile_m), lambda i: (0, 0, i)),       # coords_n
            pl.BlockSpec((3, 1, tile_m), lambda i: (0, 0, i)),            # coords_i
            pl.BlockSpec((nm_pad, tile_m), lambda i: (0, i)),             # mask
            pl.BlockSpec((nm_pad, tile_m), lambda i: (0, i)),             # elem_n
            pl.BlockSpec((1, tile_m), lambda i: (0, i)),                  # elem_i
        ],
        out_specs=pl.BlockSpec((1, tile_m), lambda i: (0, i)),
        compiler_params=pltpu.CompilerParams(
            dimension_semantics=("parallel",),      # shards tiles across TCs on v7x
            vmem_limit_bytes=32 * 1024 * 1024,      # tiny footprint; fits v7x scoped VMEM
        ),
    )(params, coords_n, coords_i, mask, elem_n, elem_i)

    # lane-dense per-center partials -> final scalar reduce in plain JAX
    return jnp.sum(out)


# -----------------------------------------------------------------------------
# Glue: ragged neighbor lists -> dense padded, lane-major arrays (host-side)
# -----------------------------------------------------------------------------
def densify(nl, elements_nl, coords_np, far=FAR_SENTINEL):
    m = len(nl)
    nmax = max(len(x) - 1 for x in nl)
    nm_pad = max(8, ((nmax + 7) // 8) * 8)          # sublane-aligned neighbor axis
    m_pad = ((m + 127) // 128) * 128                # lane-aligned center axis

    cn = np.full((3, nm_pad, m_pad), far, np.float32)
    ci = np.zeros((3, 1, m_pad), np.float32)
    mask = np.zeros((nm_pad, m_pad), np.float32)
    en = np.zeros((nm_pad, m_pad), np.float32)
    ei = np.zeros((1, m_pad), np.float32)

    for i, (nli, els) in enumerate(zip(nl, elements_nl)):
        c = nli[0]
        ci[:, 0, i] = coords_np[c]
        ei[0, i] = float(els[0])
        nneigh = len(nli) - 1
        for j in range(nneigh):
            cn[:, j, i] = coords_np[nli[j + 1]]
            mask[j, i] = 1.0
            en[j, i] = float(els[j + 1])
        # padded neighbor slots: far sentinel relative to the center -> fails cutoffs
        cn[:, nneigh:, i] = coords_np[c][:, None] + far
    return cn, ci, mask, en, ei


# -----------------------------------------------------------------------------
# Pure-numpy reference (mirrors the PyTorch loops exactly)
# -----------------------------------------------------------------------------
def reference_energy(nl, elements_nl, coords_np):
    A, B, p, q = A_PARAM, B_PARAM, P_PARAM, Q_PARAM
    sigma, gamma, cutoff = SIGMA_PARAM, GAMMA_PARAM, CUTOFF_PARAM
    lam, cosb0, cutjk = LAM_PARAM, COSB0_PARAM, CUTJK_PARAM
    energy = 0.0
    for nli, els in zip(nl, elements_nl):
        n = len(nli)
        xi = coords_np[nli[0]].astype(np.float64)
        e_i = els[0]
        for j in range(1, n):
            e_j = els[j]
            xj = coords_np[nli[j]].astype(np.float64)
            rij = float(np.linalg.norm(xj - xi))
            ij = e_i + e_j
            if rij < cutoff[ij]:
                sig_r = sigma[ij] / rij
                bpq = B[ij] * sig_r ** p[ij] - sig_r ** q[ij]
                E2 = A[ij] * bpq * np.exp(sigma[ij] / (rij - cutoff[ij]))
            else:
                E2 = 0.0
            energy += 0.5 * E2
            g_ij, c_ij = gamma[ij], cutoff[ij]
            for k in range(j + 1, n):
                e_k = els[k]
                if e_i != e_j and e_j == e_k:
                    ijk = 2 - (e_i + e_j + e_k)
                    ik = e_i + e_k
                    xk = coords_np[nli[k]].astype(np.float64)
                    rik = float(np.linalg.norm(xk - xi))
                    rjk = float(np.linalg.norm(xk - xj))
                    g_ik, c_ik = gamma[ik], cutoff[ik]
                    if rij > c_ij or rik > c_ik or rjk > cutjk[ijk]:
                        E3 = 0.0
                    else:
                        cosb = (rij ** 2 + rik ** 2 - rjk ** 2) / (2 * rij * rik)
                        E3 = lam[ijk] * np.exp(g_ij / (rij - c_ij) + g_ik / (rik - c_ik)) \
                             * (cosb - cosb0[ijk]) ** 2
                    energy += E3
    return energy


# -----------------------------------------------------------------------------
# main
# -----------------------------------------------------------------------------
if __name__ == "__main__":
    # TODO(synk): forces (autograd w.r.t. coords) are not part of the forward() output
    # and are not implemented here; only the configuration energy is produced.
    key = jax.random.PRNGKey(0)
    k_coord, k_elem = jax.random.split(key)

    N_ATOMS = 16
    M_CENTERS = 8

    coords = np.asarray(
        jax.random.uniform(k_coord, (N_ATOMS, 3), minval=0.0, maxval=5.0),
        dtype=np.float32,
    )
    species = np.asarray(
        jax.random.bernoulli(k_elem, 0.5, (N_ATOMS,)), dtype=np.int32
    ).tolist()

    # deterministic ragged neighbor lists: nl[i] = [center, neighbors...]
    nl = []
    elements_nl = []
    for i in range(M_CENTERS):
        n_neigh = 5 + (i % 3)                       # 5, 6 or 7 neighbors
        neigh = [(i + 1 + 2 * m) % N_ATOMS for m in range(n_neigh)]
        nli = [i] + neigh
        nl.append(nli)
        elements_nl.append([species[a] for a in nli])

    cn, ci, mask, en, ei = densify(nl, elements_nl, coords)

    energy = sw_energy_pallas(
        jnp.asarray(PARAMS_PACKED),
        jnp.asarray(cn), jnp.asarray(ci), jnp.asarray(mask),
        jnp.asarray(en), jnp.asarray(ei),
    )
    energy = jax.block_until_ready(energy)

    ref = reference_energy(nl, elements_nl, coords)
    np.testing.assert_allclose(float(energy), ref, rtol=5e-3, atol=1e-3)

    print("KERNEL_OK")
</pallas_src>

<mosaic_0001>
module attributes {stable_mosaic.version = 11 : i64} {
  func.func @sw_energy_kernel(%arg0: i32, %arg1: memref<27xf32, #tpu.memory_space<smem>>, %arg2: memref<3x8x128xf32, #tpu.memory_space<vmem>>, %arg3: memref<3x1x128xf32, #tpu.memory_space<vmem>>, %arg4: memref<8x128xf32, #tpu.memory_space<vmem>>, %arg5: memref<8x128xf32, #tpu.memory_space<vmem>>, %arg6: memref<1x128xf32, #tpu.memory_space<vmem>>, %arg7: memref<1x128xf32, #tpu.memory_space<vmem>>) attributes {dimension_semantics = [#tpu.dimension_semantics<parallel>], iteration_bounds = array<i64: 1>, scalar_prefetch = 0 : i64, scratch_operands = 0 : i64, tpu.core_type = #tpu.core_type<tc>, window_params = [{transform_indices = @transform_0, window_bounds = array<i64: 27>}, {transform_indices = @transform_1, window_bounds = array<i64: 3, 8, 128>}, {transform_indices = @transform_2, window_bounds = array<i64: 3, 1, 128>}, {transform_indices = @transform_3, window_bounds = array<i64: 8, 128>}, {transform_indices = @transform_4, window_bounds = array<i64: 8, 128>}, {transform_indices = @transform_5, window_bounds = array<i64: 1, 128>}, {transform_indices = @transform_6, window_bounds = array<i64: 1, 128>}]} {
    %c0 = arith.constant 0 : index
    %c0_0 = arith.constant 0 : index
    %c0_1 = arith.constant 0 : index
    %0 = vector.load %arg2[%c0, %c0_0, %c0_1] : memref<3x8x128xf32, #tpu.memory_space<vmem>>, vector<1x8x128xf32>
    %1 = vector.shape_cast %0 : vector<1x8x128xf32> to vector<8x128xf32>
    %c1 = arith.constant 1 : index
    %c0_2 = arith.constant 0 : index
    %c0_3 = arith.constant 0 : index
    %2 = vector.load %arg2[%c1, %c0_2, %c0_3] : memref<3x8x128xf32, #tpu.memory_space<vmem>>, vector<1x8x128xf32>
    %3 = vector.shape_cast %2 : vector<1x8x128xf32> to vector<8x128xf32>
    %c2 = arith.constant 2 : index
    %c0_4 = arith.constant 0 : index
    %c0_5 = arith.constant 0 : index
    %4 = vector.load %arg2[%c2, %c0_4, %c0_5] : memref<3x8x128xf32, #tpu.memory_space<vmem>>, vector<1x8x128xf32>
    %5 = vector.shape_cast %4 : vector<1x8x128xf32> to vector<8x128xf32>
    %c0_6 = arith.constant 0 : index
    %c0_7 = arith.constant 0 : index
    %c0_8 = arith.constant 0 : index
    %6 = vector.load %arg3[%c0_6, %c0_7, %c0_8] : memref<3x1x128xf32, #tpu.memory_space<vmem>>, vector<1x1x128xf32>
    %7 = vector.shape_cast %6 : vector<1x1x128xf32> to vector<1x128xf32>
    %c1_9 = arith.constant 1 : index
    %c0_10 = arith.constant 0 : index
    %c0_11 = arith.constant 0 : index
    %8 = vector.load %arg3[%c1_9, %c0_10, %c0_11] : memref<3x1x128xf32, #tpu.memory_space<vmem>>, vector<1x1x128xf32>
    %9 = vector.shape_cast %8 : vector<1x1x128xf32> to vector<1x128xf32>
    %c2_12 = arith.constant 2 : index
    %c0_13 = arith.constant 0 : index
    %c0_14 = arith.constant 0 : index
    %10 = vector.load %arg3[%c2_12, %c0_13, %c0_14] : memref<3x1x128xf32, #tpu.memory_space<vmem>>, vector<1x1x128xf32>
    %11 = vector.shape_cast %10 : vector<1x1x128xf32> to vector<1x128xf32>
    %c0_15 = arith.constant 0 : index
    %c0_16 = arith.constant 0 : index
    %12 = vector.load %arg4[%c0_15, %c0_16] : memref<8x128xf32, #tpu.memory_space<vmem>>, vector<8x128xf32>
    %c0_17 = arith.constant 0 : index
    %c0_18 = arith.constant 0 : index
    %13 = vector.load %arg5[%c0_17, %c0_18] : memref<8x128xf32, #tpu.memory_space<vmem>>, vector<8x128xf32>
    %c0_19 = arith.constant 0 : index
    %c0_20 = arith.constant 0 : index
    %14 = vector.load %arg6[%c0_19, %c0_20] : memref<1x128xf32, #tpu.memory_space<vmem>>, vector<1x128xf32>
    %15 = vector.broadcast %7 : vector<1x128xf32> to vector<8x128xf32>
    %16 = arith.subf %1, %15 : vector<8x128xf32>
    %17 = vector.broadcast %9 : vector<1x128xf32> to vector<8x128xf32>
    %18 = arith.subf %3, %17 : vector<8x128xf32>
    %19 = vector.broadcast %11 : vector<1x128xf32> to vector<8x128xf32>
    %20 = arith.subf %5, %19 : vector<8x128xf32>
    %21 = arith.mulf %16, %16 : vector<8x128xf32>
    %22 = arith.mulf %18, %18 : vector<8x128xf32>
    %23 = arith.addf %21, %22 : vector<8x128xf32>
    %24 = arith.mulf %20, %20 : vector<8x128xf32>
    %25 = arith.addf %23, %24 : vector<8x128xf32>
    %cst = arith.constant 9.99999996E-13 : f32
    %26 = vector.broadcast %cst : f32 to vector<8x128xf32>
    %27 = arith.maximumf %25, %26 : vector<8x128xf32>
    %28 = math.rsqrt %27 : vector<8x128xf32>
    %29 = arith.mulf %25, %28 : vector<8x128xf32>
    %30 = vector.broadcast %14 : vector<1x128xf32> to vector<8x128xf32>
    %31 = arith.addf %30, %13 : vector<8x128xf32>
    %cst_21 = arith.constant 5.000000e-01 : f32
    %32 = vector.broadcast %cst_21 : f32 to vector<8x128xf32>
    %33 = arith.cmpf olt, %31, %32 : vector<8x128xf32>
    %34 = arith.extui %33 : vector<8x128xi1> to vector<8x128xi32>
    %35 = arith.sitofp %34 : vector<8x128xi32> to vector<8x128xf32>
    %cst_22 = arith.constant 1.500000e+00 : f32
    %36 = vector.broadcast %cst_22 : f32 to vector<8x128xf32>
    %37 = arith.cmpf ogt, %31, %36 : vector<8x128xf32>
    %38 = arith.extui %37 : vector<8x128xi1> to vector<8x128xi32>
    %39 = arith.sitofp %38 : vector<8x128xi32> to vector<8x128xf32>
    %cst_23 = arith.constant 1.000000e+00 : f32
    %40 = vector.broadcast %cst_23 : f32 to vector<8x128xf32>
    %41 = arith.subf %40, %35 : vector<8x128xf32>
    %42 = arith.subf %41, %39 : vector<8x128xf32>
    %c0_24 = arith.constant 0 : index
    %43 = memref.load %arg1[%c0_24] : memref<27xf32, #tpu.memory_space<smem>>
    %44 = vector.broadcast %43 : f32 to vector<8x128xf32>
    %45 = arith.mulf %35, %44 : vector<8x128xf32>
    %c1_25 = arith.constant 1 : index
    %46 = memref.load %arg1[%c1_25] : memref<27xf32, #tpu.memory_space<smem>>
    %47 = vector.broadcast %46 : f32 to vector<8x128xf32>
    %48 = arith.mulf %42, %47 : vector<8x128xf32>
    %49 = arith.addf %45, %48 : vector<8x128xf32>
    %c2_26 = arith.constant 2 : index
    %50 = memref.load %arg1[%c2_26] : memref<27xf32, #tpu.memory_space<smem>>
    %51 = vector.broadcast %50 : f32 to vector<8x128xf32>
    %52 = arith.mulf %39, %51 : vector<8x128xf32>
    %53 = arith.addf %49, %52 : vector<8x128xf32>
    %c3 = arith.constant 3 : index
    %54 = memref.load %arg1[%c3] : memref<27xf32, #tpu.memory_space<smem>>
    %55 = vector.broadcast %54 : f32 to vector<8x128xf32>
    %56 = arith.mulf %35, %55 : vector<8x128xf32>
    %c4 = arith.constant 4 : index
    %57 = memref.load %arg1[%c4] : memref<27xf32, #tpu.memory_space<smem>>
    %58 = vector.broadcast %57 : f32 to vector<8x128xf32>
    %59 = arith.mulf %42, %58 : vector<8x128xf32>
    %60 = arith.addf %56, %59 : vector<8x128xf32>
    %c5 = arith.constant 5 : index
    %61 = memref.load %arg1[%c5] : memref<27xf32, #tpu.memory_space<smem>>
    %62 = vector.broadcast %61 : f32 to vector<8x128xf32>
    %63 = arith.mulf %39, %62 : vector<8x128xf32>
    %64 = arith.addf %60, %63 : vector<8x128xf32>
    %c12 = arith.constant 12 : index
    %65 = memref.load %arg1[%c12] : memref<27xf32, #tpu.memory_space<smem>>
    %66 = vector.broadcast %65 : f32 to vector<8x128xf32>
    %67 = arith.mulf %35, %66 : vector<8x128xf32>
    %c13 = arith.constant 13 : index
    %68 = memref.load %arg1[%c13] : memref<27xf32, #tpu.memory_space<smem>>
    %69 = vector.broadcast %68 : f32 to vector<8x128xf32>
    %70 = arith.mulf %42, %69 : vector<8x128xf32>
    %71 = arith.addf %67, %70 : vector<8x128xf32>
    %c14 = arith.constant 14 : index
    %72 = memref.load %arg1[%c14] : memref<27xf32, #tpu.memory_space<smem>>
    %73 = vector.broadcast %72 : f32 to vector<8x128xf32>
    %74 = arith.mulf %39, %73 : vector<8x128xf32>
    %75 = arith.addf %71, %74 : vector<8x128xf32>
    %c15 = arith.constant 15 : index
    %76 = memref.load %arg1[%c15] : memref<27xf32, #tpu.memory_space<smem>>
    %77 = vector.broadcast %76 : f32 to vector<8x128xf32>
    %78 = arith.mulf %35, %77 : vector<8x128xf32>
    %c16 = arith.constant 16 : index
    %79 = memref.load %arg1[%c16] : memref<27xf32, #tpu.memory_space<smem>>
    %80 = vector.broadcast %79 : f32 to vector<8x128xf32>
    %81 = arith.mulf %42, %80 : vector<8x128xf32>
    %82 = arith.addf %78, %81 : vector<8x128xf32>
    %c17 = arith.constant 17 : index
    %83 = memref.load %arg1[%c17] : memref<27xf32, #tpu.memory_space<smem>>
    %84 = vector.broadcast %83 : f32 to vector<8x128xf32>
    %85 = arith.mulf %39, %84 : vector<8x128xf32>
    %86 = arith.addf %82, %85 : vector<8x128xf32>
    %c18 = arith.constant 18 : index
    %87 = memref.load %arg1[%c18] : memref<27xf32, #tpu.memory_space<smem>>
    %88 = vector.broadcast %87 : f32 to vector<8x128xf32>
    %89 = arith.mulf %35, %88 : vector<8x128xf32>
    %c19 = arith.constant 19 : index
    %90 = memref.load %arg1[%c19] : memref<27xf32, #tpu.memory_space<smem>>
    %91 = vector.broadcast %90 : f32 to vector<8x128xf32>
    %92 = arith.mulf %42, %91 : vector<8x128xf32>
    %93 = arith.addf %89, %92 : vector<8x128xf32>
    %c20 = arith.constant 20 : index
    %94 = memref.load %arg1[%c20] : memref<27xf32, #tpu.memory_space<smem>>
    %95 = vector.broadcast %94 : f32 to vector<8x128xf32>
    %96 = arith.mulf %39, %95 : vector<8x128xf32>
    %97 = arith.addf %93, %96 : vector<8x128xf32>
    %98 = arith.subf %29, %97 : vector<8x128xf32>
    %cst_27 = arith.constant -9.99999997E-7 : f32
    %99 = vector.broadcast %cst_27 : f32 to vector<8x128xf32>
    %100 = arith.minimumf %98, %99 : vector<8x128xf32>
    %101 = tpu.reciprocal %100 {approx = true} : vector<8x128xf32> -> vector<8x128xf32>
    %102 = arith.mulf %75, %28 : vector<8x128xf32>
    %103 = arith.mulf %102, %102 : vector<8x128xf32>
    %104 = arith.mulf %103, %103 : vector<8x128xf32>
    %105 = arith.mulf %104, %102 : vector<8x128xf32>
    %106 = arith.mulf %64, %105 : vector<8x128xf32>
    %cst_28 = arith.constant 1.000000e+00 : f32
    %107 = vector.broadcast %cst_28 : f32 to vector<8x128xf32>
    %108 = arith.subf %106, %107 : vector<8x128xf32>
    %109 = arith.mulf %53, %108 : vector<8x128xf32>
    %110 = arith.mulf %75, %101 : vector<8x128xf32>
    %111 = math.exp %110 : vector<8x128xf32>
    %112 = arith.mulf %109, %111 : vector<8x128xf32>
    %cst_29 = arith.constant 2.000000e+00 : f32
    %113 = vector.broadcast %cst_29 : f32 to vector<8x128xf32>
    %114 = arith.mulf %113, %13 : vector<8x128xf32>
    %115 = vector.broadcast %14 : vector<1x128xf32> to vector<8x128xf32>
    %116 = arith.addf %115, %114 : vector<8x128xf32>
    %cst_30 = arith.constant 1.500000e+00 : f32
    %117 = vector.broadcast %cst_30 : f32 to vector<8x128xf32>
    %118 = arith.cmpf ogt, %116, %117 : vector<8x128xf32>
    %c21 = arith.constant 21 : index
    %119 = memref.load %arg1[%c21] : memref<27xf32, #tpu.memory_space<smem>>
    %c22 = arith.constant 22 : index
    %120 = memref.load %arg1[%c22] : memref<27xf32, #tpu.memory_space<smem>>
    %121 = vector.broadcast %119 : f32 to vector<8x128xf32>
    %122 = vector.broadcast %120 : f32 to vector<8x128xf32>
    %123 = arith.select %118, %121, %122 : vector<8x128xi1>, vector<8x128xf32>
    %c25 = arith.constant 25 : index
    %124 = memref.load %arg1[%c25] : memref<27xf32, #tpu.memory_space<smem>>
    %c26 = arith.constant 26 : index
    %125 = memref.load %arg1[%c26] : memref<27xf32, #tpu.memory_space<smem>>
    %126 = vector.broadcast %124 : f32 to vector<8x128xf32>
    %127 = vector.broadcast %125 : f32 to vector<8x128xf32>
    %128 = arith.select %118, %126, %127 : vector<8x128xi1>, vector<8x128xf32>
    %129 = arith.mulf %128, %128 : vector<8x128xf32>
    %c23 = arith.constant 23 : index
    %130 = memref.load %arg1[%c23] : memref<27xf32, #tpu.memory_space<smem>>
    %cst_31 = arith.constant 5.000000e-01 : f32
    %131 = vector.broadcast %cst_31 : f32 to vector<8x128xf32>
    %132 = arith.cmpf ogt, %12, %131 : vector<8x128xf32>
    %133 = vector.broadcast %14 : vector<1x128xf32> to vector<8x128xf32>
    %134 = arith.cmpf one, %13, %133 : vector<8x128xf32>
    %135 = arith.andi %132, %134 : vector<8x128xi1>
    %136 = arith.mulf %86, %101 : vector<8x128xf32>
    %137 = math.exp %136 : vector<8x128xf32>
    %cst_32 = arith.constant 0.000000e+00 : f32
    %138 = vector.broadcast %cst_32 : f32 to vector<8x128xf32>
    %139 = arith.select %135, %137, %138 : vector<8x128xi1>, vector<8x128xf32>
    %140 = arith.mulf %123, %139 : vector<8x128xf32>
    %cst_33 = arith.constant 0.000000e+00 : f32
    %141 = vector.broadcast %cst_33 : f32 to vector<1x128xf32>
    %142 = vector.extract_strided_slice %16 {offsets = [0, 0], sizes = [1, 128], strides = [1, 1]} : vector<8x128xf32> to vector<1x128xf32>
    %143 = vector.extract_strided_slice %18 {offsets = [0, 0], sizes = [1, 128], strides = [1, 1]} : vector<8x128xf32> to vector<1x128xf32>
    %144 = vector.extract_strided_slice %20 {offsets = [0, 0], sizes = [1, 128], strides = [1, 1]} : vector<8x128xf32> to vector<1x128xf32>
    %145 = vector.broadcast %142 : vector<1x128xf32> to vector<8x128xf32>
    %146 = arith.mulf %16, %145 : vector<8x128xf32>
    %147 = vector.broadcast %143 : vector<1x128xf32> to vector<8x128xf32>
    %148 = arith.mulf %18, %147 : vector<8x128xf32>
    %149 = arith.addf %146, %148 : vector<8x128xf32>
    %150 = vector.broadcast %144 : vector<1x128xf32> to vector<8x128xf32>
    %151 = arith.mulf %20, %150 : vector<8x128xf32>
    %152 = arith.addf %149, %151 : vector<8x128xf32>
    %153 = vector.extract_strided_slice %25 {offsets = [0, 0], sizes = [1, 128], strides = [1, 1]} : vector<8x128xf32> to vector<1x128xf32>
    %154 = vector.broadcast %153 : vector<1x128xf32> to vector<8x128xf32>
    %155 = arith.addf %25, %154 : vector<8x128xf32>
    %cst_34 = arith.constant 2.000000e+00 : f32
    %156 = vector.broadcast %cst_34 : f32 to vector<8x128xf32>
    %157 = arith.mulf %156, %152 : vector<8x128xf32>
    %158 = arith.subf %155, %157 : vector<8x128xf32>
    %159 = vector.extract_strided_slice %28 {offsets = [0, 0], sizes = [1, 128], strides = [1, 1]} : vector<8x128xf32> to vector<1x128xf32>
    %160 = vector.broadcast %159 : vector<1x128xf32> to vector<8x128xf32>
    %161 = arith.mulf %28, %160 : vector<8x128xf32>
    %162 = arith.mulf %152, %161 : vector<8x128xf32>
    %163 = vector.broadcast %130 : f32 to vector<8x128xf32>
    %164 = arith.subf %162, %163 : vector<8x128xf32>
    %165 = vector.extract_strided_slice %129 {offsets = [0, 0], sizes = [1, 128], strides = [1, 1]} : vector<8x128xf32> to vector<1x128xf32>
    %166 = vector.broadcast %165 : vector<1x128xf32> to vector<8x128xf32>
    %167 = arith.cmpf ole, %158, %166 : vector<8x128xf32>
    %168 = arith.mulf %164, %164 : vector<8x128xf32>
    %169 = arith.mulf %139, %168 : vector<8x128xf32>
    %cst_35 = arith.constant 0.000000e+00 : f32
    %170 = vector.broadcast %cst_35 : f32 to vector<8x128xf32>
    %171 = arith.select %167, %169, %170 : vector<8x128xi1>, vector<8x128xf32>
    %172 = vector.extract_strided_slice %140 {offsets = [0, 0], sizes = [1, 128], strides = [1, 1]} : vector<8x128xf32> to vector<1x128xf32>
    %cst_36 = arith.constant dense<0.000000e+00> : vector<128xf32>
    %173 = vector.multi_reduction <add>, %171, %cst_36 [0] : vector<8x128xf32> to vector<128xf32>
    %174 = vector.shape_cast %173 : vector<128xf32> to vector<1x128xf32>
    %175 = arith.mulf %172, %174 : vector<1x128xf32>
    %176 = arith.addf %141, %175 : vector<1x128xf32>
    %177 = vector.extract_strided_slice %16 {offsets = [1, 0], sizes = [1, 128], strides = [1, 1]} : vector<8x128xf32> to vector<1x128xf32>
    %178 = vector.extract_strided_slice %18 {offsets = [1, 0], sizes = [1, 128], strides = [1, 1]} : vector<8x128xf32> to vector<1x128xf32>
    %179 = vector.extract_strided_slice %20 {offsets = [1, 0], sizes = [1, 128], strides = [1, 1]} : vector<8x128xf32> to vector<1x128xf32>
    %180 = vector.broadcast %177 : vector<1x128xf32> to vector<8x128xf32>
    %181 = arith.mulf %16, %180 : vector<8x128xf32>
    %182 = vector.broadcast %178 : vector<1x128xf32> to vector<8x128xf32>
    %183 = arith.mulf %18, %182 : vector<8x128xf32>
    %184 = arith.addf %181, %183 : vector<8x128xf32>
    %185 = vector.broadcast %179 : vector<1x128xf32> to vector<8x128xf32>
    %186 = arith.mulf %20, %185 : vector<8x128xf32>
    %187 = arith.addf %184, %186 : vector<8x128xf32>
    %188 = vector.extract_strided_slice %25 {offsets = [1, 0], sizes = [1, 128], strides = [1, 1]} : vector<8x128xf32> to vector<1x128xf32>
    %189 = vector.broadcast %188 : vector<1x128xf32> to vector<8x128xf32>
    %190 = arith.addf %25, %189 : vector<8x128xf32>
    %cst_37 = arith.constant 2.000000e+00 : f32
    %191 = vector.broadcast %cst_37 : f32 to vector<8x128xf32>
    %192 = arith.mulf %191, %187 : vector<8x128xf32>
    %193 = arith.subf %190, %192 : vector<8x128xf32>
    %194 = vector.extract_strided_slice %28 {offsets = [1, 0], sizes = [1, 128], strides = [1, 1]} : vector<8x128xf32> to vector<1x128xf32>
    %195 = vector.broadcast %194 : vector<1x128xf32> to vector<8x128xf32>
    %196 = arith.mulf %28, %195 : vector<8x128xf32>
    %197 = arith.mulf %187, %196 : vector<8x128xf32>
    %198 = vector.broadcast %130 : f32 to vector<8x128xf32>
    %199 = arith.subf %197, %198 : vector<8x128xf32>
    %200 = vector.extract_strided_slice %129 {offsets = [1, 0], sizes = [1, 128], strides = [1, 1]} : vector<8x128xf32> to vector<1x128xf32>
    %201 = vector.broadcast %200 : vector<1x128xf32> to vector<8x128xf32>
    %202 = arith.cmpf ole, %193, %201 : vector<8x128xf32>
    %203 = arith.mulf %199, %199 : vector<8x128xf32>
    %204 = arith.mulf %139, %203 : vector<8x128xf32>
    %cst_38 = arith.constant 0.000000e+00 : f32
    %205 = vector.broadcast %cst_38 : f32 to vector<8x128xf32>
    %206 = arith.select %202, %204, %205 : vector<8x128xi1>, vector<8x128xf32>
    %207 = vector.extract_strided_slice %140 {offsets = [1, 0], sizes = [1, 128], strides = [1, 1]} : vector<8x128xf32> to vector<1x128xf32>
    %cst_39 = arith.constant dense<0.000000e+00> : vector<128xf32>
    %208 = vector.multi_reduction <add>, %206, %cst_39 [0] : vector<8x128xf32> to vector<128xf32>
    %209 = vector.shape_cast %208 : vector<128xf32> to vector<1x128xf32>
    %210 = arith.mulf %207, %209 : vector<1x128xf32>
    %211 = arith.addf %176, %210 : vector<1x128xf32>
    %212 = vector.extract_strided_slice %16 {offsets = [2, 0], sizes = [1, 128], strides = [1, 1]} : vector<8x128xf32> to vector<1x128xf32>
    %213 = vector.extract_strided_slice %18 {offsets = [2, 0], sizes = [1, 128], strides = [1, 1]} : vector<8x128xf32> to vector<1x128xf32>
    %214 = vector.extract_strided_slice %20 {offsets = [2, 0], sizes = [1, 128], strides = [1, 1]} : vector<8x128xf32> to vector<1x128xf32>
    %215 = vector.broadcast %212 : vector<1x128xf32> to vector<8x128xf32>
    %216 = arith.mulf %16, %215 : vector<8x128xf32>
    %217 = vector.broadcast %213 : vector<1x128xf32> to vector<8x128xf32>
    %218 = arith.mulf %18, %217 : vector<8x128xf32>
    %219 = arith.addf %216, %218 : vector<8x128xf32>
    %220 = vector.broadcast %214 : vector<1x128xf32> to vector<8x128xf32>
    %221 = arith.mulf %20, %220 : vector<8x128xf32>
    %222 = arith.addf %219, %221 : vector<8x128xf32>
    %223 = vector.extract_strided_slice %25 {offsets = [2, 0], sizes = [1, 128], strides = [1, 1]} : vector<8x128xf32> to vector<1x128xf32>
    %224 = vector.broadcast %223 : vector<1x128xf32> to vector<8x128xf32>
    %225 = arith.addf %25, %224 : vector<8x128xf32>
    %cst_40 = arith.constant 2.000000e+00 : f32
    %226 = vector.broadcast %cst_40 : f32 to vector<8x128xf32>
    %227 = arith.mulf %226, %222 : vector<8x128xf32>
    %228 = arith.subf %225, %227 : vector<8x128xf32>
    %229 = vector.extract_strided_slice %28 {offsets = [2, 0], sizes = [1, 128], strides = [1, 1]} : vector<8x128xf32> to vector<1x128xf32>
    %230 = vector.broadcast %229 : vector<1x128xf32> to vector<8x128xf32>
    %231 = arith.mulf %28, %230 : vector<8x128xf32>
    %232 = arith.mulf %222, %231 : vector<8x128xf32>
    %233 = vector.broadcast %130 : f32 to vector<8x128xf32>
    %234 = arith.subf %232, %233 : vector<8x128xf32>
    %235 = vector.extract_strided_slice %129 {offsets = [2, 0], sizes = [1, 128], strides = [1, 1]} : vector<8x128xf32> to vector<1x128xf32>
    %236 = vector.broadcast %235 : vector<1x128xf32> to vector<8x128xf32>
    %237 = arith.cmpf ole, %228, %236 : vector<8x128xf32>
    %238 = arith.mulf %234, %234 : vector<8x128xf32>
    %239 = arith.mulf %139, %238 : vector<8x128xf32>
    %cst_41 = arith.constant 0.000000e+00 : f32
    %240 = vector.broadcast %cst_41 : f32 to vector<8x128xf32>
    %241 = arith.select %237, %239, %240 : vector<8x128xi1>, vector<8x128xf32>
    %242 = vector.extract_strided_slice %140 {offsets = [2, 0], sizes = [1, 128], strides = [1, 1]} : vector<8x128xf32> to vector<1x128xf32>
    %cst_42 = arith.constant dense<0.000000e+00> : vector<128xf32>
    %243 = vector.multi_reduction <add>, %241, %cst_42 [0] : vector<8x128xf32> to vector<128xf32>
    %244 = vector.shape_cast %243 : vector<128xf32> to vector<1x128xf32>
    %245 = arith.mulf %242, %244 : vector<1x128xf32>
    %246 = arith.addf %211, %245 : vector<1x128xf32>
    %247 = vector.extract_strided_slice %16 {offsets = [3, 0], sizes = [1, 128], strides = [1, 1]} : vector<8x128xf32> to vector<1x128xf32>
    %248 = vector.extract_strided_slice %18 {offsets = [3, 0], sizes = [1, 128], strides = [1, 1]} : vector<8x128xf32> to vector<1x128xf32>
    %249 = vector.extract_strided_slice %20 {offsets = [3, 0], sizes = [1, 128], strides = [1, 1]} : vector<8x128xf32> to vector<1x128xf32>
    %250 = vector.broadcast %247 : vector<1x128xf32> to vector<8x128xf32>
    %251 = arith.mulf %16, %250 : vector<8x128xf32>
    %252 = vector.broadcast %248 : vector<1x128xf32> to vector<8x128xf32>
    %253 = arith.mulf %18, %252 : vector<8x128xf32>
    %254 = arith.addf %251, %253 : vector<8x128xf32>
    %255 = vector.broadcast %249 : vector<1x128xf32> to vector<8x128xf32>
    %256 = arith.mulf %20, %255 : vector<8x128xf32>
    %257 = arith.addf %254, %256 : vector<8x128xf32>
    %258 = vector.extract_strided_slice %25 {offsets = [3, 0], sizes = [1, 128], strides = [1, 1]} : vector<8x128xf32> to vector<1x128xf32>
    %259 = vector.broadcast %258 : vector<1x128xf32> to vector<8x128xf32>
    %260 = arith.addf %25, %259 : vector<8x128xf32>
    %cst_43 = arith.constant 2.000000e+00 : f32
    %261 = vector.broadcast %cst_43 : f32 to vector<8x128xf32>
    %262 = arith.mulf %261, %257 : vector<8x128xf32>
    %263 = arith.subf %260, %262 : vector<8x128xf32>
    %264 = vector.extract_strided_slice %28 {offsets = [3, 0], sizes = [1, 128], strides = [1, 1]} : vector<8x128xf32> to vector<1x128xf32>
    %265 = vector.broadcast %264 : vector<1x128xf32> to vector<8x128xf32>
    %266 = arith.mulf %28, %265 : vector<8x128xf32>
    %267 = arith.mulf %257, %266 : vector<8x128xf32>
    %268 = vector.broadcast %130 : f32 to vector<8x128xf32>
    %269 = arith.subf %267, %268 : vector<8x128xf32>
    %270 = vector.extract_strided_slice %129 {offsets = [3, 0], sizes = [1, 128], strides = [1, 1]} : vector<8x128xf32> to vector<1x128xf32>
    %271 = vector.broadcast %270 : vector<1x128xf32> to vector<8x128xf32>
    %272 = arith.cmpf ole, %263, %271 : vector<8x128xf32>
    %273 = arith.mulf %269, %269 : vector<8x128xf32>
    %274 = arith.mulf %139, %273 : vector<8x128xf32>
    %cst_44 = arith.constant 0.000000e+00 : f32
    %275 = vector.broadcast %cst_44 : f32 to vector<8x128xf32>
    %276 = arith.select %272, %274, %275 : vector<8x128xi1>, vector<8x128xf32>
    %277 = vector.extract_strided_slice %140 {offsets = [3, 0], sizes = [1, 128], strides = [1, 1]} : vector<8x128xf32> to vector<1x128xf32>
    %cst_45 = arith.constant dense<0.000000e+00> : vector<128xf32>
    %278 = vector.multi_reduction <add>, %276, %cst_45 [0] : vector<8x128xf32> to vector<128xf32>
    %279 = vector.shape_cast %278 : vector<128xf32> to vector<1x128xf32>
    %280 = arith.mulf %277, %279 : vector<1x128xf32>
    %281 = arith.addf %246, %280 : vector<1x128xf32>
    %282 = vector.extract_strided_slice %16 {offsets = [4, 0], sizes = [1, 128], strides = [1, 1]} : vector<8x128xf32> to vector<1x128xf32>
    %283 = vector.extract_strided_slice %18 {offsets = [4, 0], sizes = [1, 128], strides = [1, 1]} : vector<8x128xf32> to vector<1x128xf32>
    %284 = vector.extract_strided_slice %20 {offsets = [4, 0], sizes = [1, 128], strides = [1, 1]} : vector<8x128xf32> to vector<1x128xf32>
    %285 = vector.broadcast %282 : vector<1x128xf32> to vector<8x128xf32>
    %286 = arith.mulf %16, %285 : vector<8x128xf32>
    %287 = vector.broadcast %283 : vector<1x128xf32> to vector<8x128xf32>
    %288 = arith.mulf %18, %287 : vector<8x128xf32>
    %289 = arith.addf %286, %288 : vector<8x128xf32>
    %290 = vector.broadcast %284 : vector<1x128xf32> to vector<8x128xf32>
    %291 = arith.mulf %20, %290 : vector<8x128xf32>
    %292 = arith.addf %289, %291 : vector<8x128xf32>
    %293 = vector.extract_strided_slice %25 {offsets = [4, 0], sizes = [1, 128], strides = [1, 1]} : vector<8x128xf32> to vector<1x128xf32>
    %294 = vector.broadcast %293 : vector<1x128xf32> to vector<8x128xf32>
    %295 = arith.addf %25, %294 : vector<8x128xf32>
    %cst_46 = arith.constant 2.000000e+00 : f32
    %296 = vector.broadcast %cst_46 : f32 to vector<8x128xf32>
    %297 = arith.mulf %296, %292 : vector<8x128xf32>
    %298 = arith.subf %295, %297 : vector<8x128xf32>
    %299 = vector.extract_strided_slice %28 {offsets = [4, 0], sizes = [1, 128], strides = [1, 1]} : vector<8x128xf32> to vector<1x128xf32>
    %300 = vector.broadcast %299 : vector<1x128xf32> to vector<8x128xf32>
    %301 = arith.mulf %28, %300 : vector<8x128xf32>
    %302 = arith.mulf %292, %301 : vector<8x128xf32>
    %303 = vector.broadcast %130 : f32 to vector<8x128xf32>
    %304 = arith.subf %302, %303 : vector<8x128xf32>
    %305 = vector.extract_strided_slice %129 {offsets = [4, 0], sizes = [1, 128], strides = [1, 1]} : vector<8x128xf32> to vector<1x128xf32>
    %306 = vector.broadcast %305 : vector<1x128xf32> to vector<8x128xf32>
    %307 = arith.cmpf ole, %298, %306 : vector<8x128xf32>
    %308 = arith.mulf %304, %304 : vector<8x128xf32>
    %309 = arith.mulf %139, %308 : vector<8x128xf32>
    %cst_47 = arith.constant 0.000000e+00 : f32
    %310 = vector.broadcast %cst_47 : f32 to vector<8x128xf32>
    %311 = arith.select %307, %309, %310 : vector<8x128xi1>, vector<8x128xf32>
    %312 = vector.extract_strided_slice %140 {offsets = [4, 0], sizes = [1, 128], strides = [1, 1]} : vector<8x128xf32> to vector<1x128xf32>
    %cst_48 = arith.constant dense<0.000000e+00> : vector<128xf32>
    %313 = vector.multi_reduction <add>, %311, %cst_48 [0] : vector<8x128xf32> to vector<128xf32>
    %314 = vector.shape_cast %313 : vector<128xf32> to vector<1x128xf32>
    %315 = arith.mulf %312, %314 : vector<1x128xf32>
    %316 = arith.addf %281, %315 : vector<1x128xf32>
    %317 = vector.extract_strided_slice %16 {offsets = [5, 0], sizes = [1, 128], strides = [1, 1]} : vector<8x128xf32> to vector<1x128xf32>
    %318 = vector.extract_strided_slice %18 {offsets = [5, 0], sizes = [1, 128], strides = [1, 1]} : vector<8x128xf32> to vector<1x128xf32>
    %319 = vector.extract_strided_slice %20 {offsets = [5, 0], sizes = [1, 128], strides = [1, 1]} : vector<8x128xf32> to vector<1x128xf32>
    %320 = vector.broadcast %317 : vector<1x128xf32> to vector<8x128xf32>
    %321 = arith.mulf %16, %320 : vector<8x128xf32>
    %322 = vector.broadcast %318 : vector<1x128xf32> to vector<8x128xf32>
    %323 = arith.mulf %18, %322 : vector<8x128xf32>
    %324 = arith.addf %321, %323 : vector<8x128xf32>
    %325 = vector.broadcast %319 : vector<1x128xf32> to vector<8x128xf32>
    %326 = arith.mulf %20, %325 : vector<8x128xf32>
    %327 = arith.addf %324, %326 : vector<8x128xf32>
    %328 = vector.extract_strided_slice %25 {offsets = [5, 0], sizes = [1, 128], strides = [1, 1]} : vector<8x128xf32> to vector<1x128xf32>
    %329 = vector.broadcast %328 : vector<1x128xf32> to vector<8x128xf32>
    %330 = arith.addf %25, %329 : vector<8x128xf32>
    %cst_49 = arith.constant 2.000000e+00 : f32
    %331 = vector.broadcast %cst_49 : f32 to vector<8x128xf32>
    %332 = arith.mulf %331, %327 : vector<8x128xf32>
    %333 = arith.subf %330, %332 : vector<8x128xf32>
    %334 = vector.extract_strided_slice %28 {offsets = [5, 0], sizes = [1, 128], strides = [1, 1]} : vector<8x128xf32> to vector<1x128xf32>
    %335 = vector.broadcast %334 : vector<1x128xf32> to vector<8x128xf32>
    %336 = arith.mulf %28, %335 : vector<8x128xf32>
    %337 = arith.mulf %327, %336 : vector<8x128xf32>
    %338 = vector.broadcast %130 : f32 to vector<8x128xf32>
    %339 = arith.subf %337, %338 : vector<8x128xf32>
    %340 = vector.extract_strided_slice %129 {offsets = [5, 0], sizes = [1, 128], strides = [1, 1]} : vector<8x128xf32> to vector<1x128xf32>
    %341 = vector.broadcast %340 : vector<1x128xf32> to vector<8x128xf32>
    %342 = arith.cmpf ole, %333, %341 : vector<8x128xf32>
    %343 = arith.mulf %339, %339 : vector<8x128xf32>
    %344 = arith.mulf %139, %343 : vector<8x128xf32>
    %cst_50 = arith.constant 0.000000e+00 : f32
    %345 = vector.broadcast %cst_50 : f32 to vector<8x128xf32>
    %346 = arith.select %342, %344, %345 : vector<8x128xi1>, vector<8x128xf32>
    %347 = vector.extract_strided_slice %140 {offsets = [5, 0], sizes = [1, 128], strides = [1, 1]} : vector<8x128xf32> to vector<1x128xf32>
    %cst_51 = arith.constant dense<0.000000e+00> : vector<128xf32>
    %348 = vector.multi_reduction <add>, %346, %cst_51 [0] : vector<8x128xf32> to vector<128xf32>
    %349 = vector.shape_cast %348 : vector<128xf32> to vector<1x128xf32>
    %350 = arith.mulf %347, %349 : vector<1x128xf32>
    %351 = arith.addf %316, %350 : vector<1x128xf32>
    %352 = vector.extract_strided_slice %16 {offsets = [6, 0], sizes = [1, 128], strides = [1, 1]} : vector<8x128xf32> to vector<1x128xf32>
    %353 = vector.extract_strided_slice %18 {offsets = [6, 0], sizes = [1, 128], strides = [1, 1]} : vector<8x128xf32> to vector<1x128xf32>
    %354 = vector.extract_strided_slice %20 {offsets = [6, 0], sizes = [1, 128], strides = [1, 1]} : vector<8x128xf32> to vector<1x128xf32>
    %355 = vector.broadcast %352 : vector<1x128xf32> to vector<8x128xf32>
    %356 = arith.mulf %16, %355 : vector<8x128xf32>
    %357 = vector.broadcast %353 : vector<1x128xf32> to vector<8x128xf32>
    %358 = arith.mulf %18, %357 : vector<8x128xf32>
    %359 = arith.addf %356, %358 : vector<8x128xf32>
    %360 = vector.broadcast %354 : vector<1x128xf32> to vector<8x128xf32>
    %361 = arith.mulf %20, %360 : vector<8x128xf32>
    %362 = arith.addf %359, %361 : vector<8x128xf32>
    %363 = vector.extract_strided_slice %25 {offsets = [6, 0], sizes = [1, 128], strides = [1, 1]} : vector<8x128xf32> to vector<1x128xf32>
    %364 = vector.broadcast %363 : vector<1x128xf32> to vector<8x128xf32>
    %365 = arith.addf %25, %364 : vector<8x128xf32>
    %cst_52 = arith.constant 2.000000e+00 : f32
    %366 = vector.broadcast %cst_52 : f32 to vector<8x128xf32>
    %367 = arith.mulf %366, %362 : vector<8x128xf32>
    %368 = arith.subf %365, %367 : vector<8x128xf32>
    %369 = vector.extract_strided_slice %28 {offsets = [6, 0], sizes = [1, 128], strides = [1, 1]} : vector<8x128xf32> to vector<1x128xf32>
    %370 = vector.broadcast %369 : vector<1x128xf32> to vector<8x128xf32>
    %371 = arith.mulf %28, %370 : vector<8x128xf32>
    %372 = arith.mulf %362, %371 : vector<8x128xf32>
    %373 = vector.broadcast %130 : f32 to vector<8x128xf32>
    %374 = arith.subf %372, %373 : vector<8x128xf32>
    %375 = vector.extract_strided_slice %129 {offsets = [6, 0], sizes = [1, 128], strides = [1, 1]} : vector<8x128xf32> to vector<1x128xf32>
    %376 = vector.broadcast %375 : vector<1x128xf32> to vector<8x128xf32>
    %377 = arith.cmpf ole, %368, %376 : vector<8x128xf32>
    %378 = arith.mulf %374, %374 : vector<8x128xf32>
    %379 = arith.mulf %139, %378 : vector<8x128xf32>
    %cst_53 = arith.constant 0.000000e+00 : f32
    %380 = vector.broadcast %cst_53 : f32 to vector<8x128xf32>
    %381 = arith.select %377, %379, %380 : vector<8x128xi1>, vector<8x128xf32>
    %382 = vector.extract_strided_slice %140 {offsets = [6, 0], sizes = [1, 128], strides = [1, 1]} : vector<8x128xf32> to vector<1x128xf32>
    %cst_54 = arith.constant dense<0.000000e+00> : vector<128xf32>
    %383 = vector.multi_reduction <add>, %381, %cst_54 [0] : vector<8x128xf32> to vector<128xf32>
    %384 = vector.shape_cast %383 : vector<128xf32> to vector<1x128xf32>
    %385 = arith.mulf %382, %384 : vector<1x128xf32>
    %386 = arith.addf %351, %385 : vector<1x128xf32>
    %387 = vector.extract_strided_slice %16 {offsets = [7, 0], sizes = [1, 128], strides = [1, 1]} : vector<8x128xf32> to vector<1x128xf32>
    %388 = vector.extract_strided_slice %18 {offsets = [7, 0], sizes = [1, 128], strides = [1, 1]} : vector<8x128xf32> to vector<1x128xf32>
    %389 = vector.extract_strided_slice %20 {offsets = [7, 0], sizes = [1, 128], strides = [1, 1]} : vector<8x128xf32> to vector<1x128xf32>
    %390 = vector.broadcast %387 : vector<1x128xf32> to vector<8x128xf32>
    %391 = arith.mulf %16, %390 : vector<8x128xf32>
    %392 = vector.broadcast %388 : vector<1x128xf32> to vector<8x128xf32>
    %393 = arith.mulf %18, %392 : vector<8x128xf32>
    %394 = arith.addf %391, %393 : vector<8x128xf32>
    %395 = vector.broadcast %389 : vector<1x128xf32> to vector<8x128xf32>
    %396 = arith.mulf %20, %395 : vector<8x128xf32>
    %397 = arith.addf %394, %396 : vector<8x128xf32>
    %398 = vector.extract_strided_slice %25 {offsets = [7, 0], sizes = [1, 128], strides = [1, 1]} : vector<8x128xf32> to vector<1x128xf32>
    %399 = vector.broadcast %398 : vector<1x128xf32> to vector<8x128xf32>
    %400 = arith.addf %25, %399 : vector<8x128xf32>
    %cst_55 = arith.constant 2.000000e+00 : f32
    %401 = vector.broadcast %cst_55 : f32 to vector<8x128xf32>
    %402 = arith.mulf %401, %397 : vector<8x128xf32>
    %403 = arith.subf %400, %402 : vector<8x128xf32>
    %404 = vector.extract_strided_slice %28 {offsets = [7, 0], sizes = [1, 128], strides = [1, 1]} : vector<8x128xf32> to vector<1x128xf32>
    %405 = vector.broadcast %404 : vector<1x128xf32> to vector<8x128xf32>
    %406 = arith.mulf %28, %405 : vector<8x128xf32>
    %407 = arith.mulf %397, %406 : vector<8x128xf32>
    %408 = vector.broadcast %130 : f32 to vector<8x128xf32>
    %409 = arith.subf %407, %408 : vector<8x128xf32>
    %410 = vector.extract_strided_slice %129 {offsets = [7, 0], sizes = [1, 128], strides = [1, 1]} : vector<8x128xf32> to vector<1x128xf32>
    %411 = vector.broadcast %410 : vector<1x128xf32> to vector<8x128xf32>
    %412 = arith.cmpf ole, %403, %411 : vector<8x128xf32>
    %413 = arith.mulf %409, %409 : vector<8x128xf32>
    %414 = arith.mulf %139, %413 : vector<8x128xf32>
    %cst_56 = arith.constant 0.000000e+00 : f32
    %415 = vector.broadcast %cst_56 : f32 to vector<8x128xf32>
    %416 = arith.select %412, %414, %415 : vector<8x128xi1>, vector<8x128xf32>
    %417 = vector.extract_strided_slice %140 {offsets = [7, 0], sizes = [1, 128], strides = [1, 1]} : vector<8x128xf32> to vector<1x128xf32>
    %cst_57 = arith.constant dense<0.000000e+00> : vector<128xf32>
    %418 = vector.multi_reduction <add>, %416, %cst_57 [0] : vector<8x128xf32> to vector<128xf32>
    %419 = vector.shape_cast %418 : vector<128xf32> to vector<1x128xf32>
    %420 = arith.mulf %417, %419 : vector<1x128xf32>
    %421 = arith.addf %386, %420 : vector<1x128xf32>
    %cst_58 = arith.constant 1.000000e+00 : f32
    %422 = arith.subf %cst_58, %130 : f32
    %423 = arith.mulf %140, %139 : vector<8x128xf32>
    %424 = arith.mulf %422, %422 : f32
    %425 = vector.broadcast %424 : f32 to vector<8x128xf32>
    %426 = arith.mulf %423, %425 : vector<8x128xf32>
    %cst_59 = arith.constant dense<0.000000e+00> : vector<128xf32>
    %427 = vector.multi_reduction <add>, %426, %cst_59 [0] : vector<8x128xf32> to vector<128xf32>
    %428 = vector.shape_cast %427 : vector<128xf32> to vector<1x128xf32>
    %429 = arith.subf %421, %428 : vector<1x128xf32>
    %cst_60 = arith.constant 5.000000e-01 : f32
    %430 = vector.broadcast %cst_60 : f32 to vector<1x128xf32>
    %431 = arith.mulf %430, %429 : vector<1x128xf32>
    %cst_61 = arith.constant dense<0.000000e+00> : vector<128xf32>
    %432 = vector.multi_reduction <add>, %112, %cst_61 [0] : vector<8x128xf32> to vector<128xf32>
    %433 = vector.shape_cast %432 : vector<128xf32> to vector<1x128xf32>
    %cst_62 = arith.constant 5.000000e-01 : f32
    %434 = vector.broadcast %cst_62 : f32 to vector<1x128xf32>
    %435 = arith.mulf %434, %433 : vector<1x128xf32>
    %436 = arith.addf %435, %431 : vector<1x128xf32>
    %c0_63 = arith.constant 0 : index
    %c0_64 = arith.constant 0 : index
    %437 = vector.load %arg7[%c0_63, %c0_64] : memref<1x128xf32, #tpu.memory_space<vmem>>, vector<1x128xf32>
    tpu.vector_store %arg7[%c0_63, %c0_64], %436 {strides = array<i32>} : memref<1x128xf32, #tpu.memory_space<vmem>>, vector<1x128xf32>,
    return
  }
  func.func @transform_0(%arg0: i32) -> i32 {
    %c0_i32 = arith.constant 0 : i32
    %c0_i32_0 = arith.constant 0 : i32
    return %c0_i32 : i32
  }
  func.func @transform_1(%arg0: i32) -> (i32, i32, i32) {
    %c0_i32 = arith.constant 0 : i32
    %c0_i32_0 = arith.constant 0 : i32
    %c0_i32_1 = arith.constant 0 : i32
    return %c0_i32, %c0_i32_0, %arg0 : i32, i32, i32
  }
  func.func @transform_2(%arg0: i32) -> (i32, i32, i32) {
    %c0_i32 = arith.constant 0 : i32
    %c0_i32_0 = arith.constant 0 : i32
    %c0_i32_1 = arith.constant 0 : i32
    return %c0_i32, %c0_i32_0, %arg0 : i32, i32, i32
  }
  func.func @transform_3(%arg0: i32) -> (i32, i32) {
    %c0_i32 = arith.constant 0 : i32
    %c0_i32_0 = arith.constant 0 : i32
    return %c0_i32, %arg0 : i32, i32
  }
  func.func @transform_4(%arg0: i32) -> (i32, i32) {
    %c0_i32 = arith.constant 0 : i32
    %c0_i32_0 = arith.constant 0 : i32
    return %c0_i32, %arg0 : i32, i32
  }
  func.func @transform_5(%arg0: i32) -> (i32, i32) {
    %c0_i32 = arith.constant 0 : i32
    %c0_i32_0 = arith.constant 0 : i32
    return %c0_i32, %arg0 : i32, i32
  }
  func.func @transform_6(%arg0: i32) -> (i32, i32) {
    %c0_i32 = arith.constant 0 : i32
    %c0_i32_0 = arith.constant 0 : i32
    return %c0_i32, %arg0 : i32, i32
  }
}

</mosaic_0001>

<llo_original>
// kernel: tpu_custom_call.1
$region0: #{tpu_custom_call.1}
  #allocation0 [shape = 'u32[]', space=smem, size = 0x4, offset = 0x4, fixed_abs, tag = 'smem constant byte address 0x4 - core index']
  #allocation1 [shape = 'u32[144,128]{1,0:T(1,128)}', space=vmem, size = 0x12000, scoped, tag = 'internal scratch']
  %s0 = inlined_call_operand.hbm [shape: f32[27], index: 0, kind: input, shape index: {}]
  %s1 = inlined_call_operand.hbm [shape: f32[3,8,128], index: 1, kind: input, shape index: {}]
  %s2 = inlined_call_operand.vmem [shape: f32[3,1,128], index: 2, kind: input, shape index: {}]
  %s3 = inlined_call_operand.vmem [shape: f32[8,128], index: 3, kind: input, shape index: {}]
  %s4 = inlined_call_operand.hbm [shape: f32[8,128], index: 4, kind: input, shape index: {}]
  %s5 = inlined_call_operand.vmem [shape: f32[1,128], index: 5, kind: input, shape index: {}]
  %s6 = inlined_call_operand.hbm [shape: f32[1,128], index: 6, kind: output, shape index: {}]
  %s7 = sld [smem:[#allocation0]]
  $region46: #{tpu_custom_call.1} parent=0
    _
  %s9 = ssub.s32 1, %s7
  %s10 = scalar_select 0, %s9, %s7
  $region1: #{tpu_custom_call.1} parent=0
    #allocation2 [shape = 'u8[512]{0}', space=smem, size = 0x200, scoped, tag = 'input window, operand 0, single buffered']
    #allocation3 [shape = 's32[1]{0}', space=sflag, size = 0x4, scoped, tag = 'scoped memory for tpu_custom_call.1']
    #allocation4 [shape = 's32[1]{0}', space=sflag, size = 0x4, scoped, tag = 'scoped memory for tpu_custom_call.1']
    #allocation5 [shape = 's32[1]{0}', space=sflag, size = 0x4, scoped, tag = 'scoped memory for tpu_custom_call.1']
    #allocation6 [shape = 'u8[12288]{0}', space=vmem, size = 0x3000, scoped, tag = 'input window, operand 1, single buffered']
    #allocation7 [shape = 'u8[4096]{0}', space=vmem, size = 0x1000, scoped, tag = 'input window, operand 4, single buffered']
    #allocation8 [shape = 's32[1]{0}', space=sflag, size = 0x4, scoped, tag = 'scoped memory for tpu_custom_call.1']
    #allocation9 [shape = 'u8[512]{0}', space=vmem, size = 0x400, scoped, tag = 'output window, operand 0, single buffered']
    %11 = vsyncpa [#allocation5], 0
    %12 = vsyncpa [#allocation3], 0
    %13 = vsyncpa [#allocation8], 0
    %14 = vsyncpa [#allocation4], 0
    // Predicated region
    $region2: #{tpu_custom_call.1} parent=1 // pred_check
      _
    $region3: #{tpu_custom_call.1} parent=1 // pred_check_branch
      %16 = sbr.rel (0) target = $region5
    $region4: #{tpu_custom_call.1} parent=1 // pred_region
      %s18 = ssub.s32 16, 16
      %19 = vsyncadd [#allocation5], %s18
      %22 = dma.hbm_to_smem %s0, 16, [#allocation2], [#allocation5]
    $region5: #{tpu_custom_call.1} parent=1 // pred_fallthru
      _
    // Predicated region
    $region6: #{tpu_custom_call.1} parent=1 // pred_check
      _
    $region7: #{tpu_custom_call.1} parent=1 // pred_check_branch
      %24 = sbr.rel (0) target = $region9
    $region8: #{tpu_custom_call.1} parent=1 // pred_region
      %s26 = ssub.s32 384, 384
      %27 = vsyncadd [#allocation3], %s26
      %s28 = sshll.u32 [#allocation6], 4
      %s29 = int_to_ptr.vmem [resolvable:$true] %s28
      %34 = dma.hbm_to_vmem [thread:$0]  %s1, 384, %s29, [#allocation3], 128, 128, 8
    $region9: #{tpu_custom_call.1} parent=1 // pred_fallthru
      _
    // Predicated region
    $region10: #{tpu_custom_call.1} parent=1 // pred_check
      _
    $region11: #{tpu_custom_call.1} parent=1 // pred_check_branch
      %36 = sbr.rel (0) target = $region13
    $region12: #{tpu_custom_call.1} parent=1 // pred_region
      _
    $region13: #{tpu_custom_call.1} parent=1 // pred_fallthru
      _
    // Predicated region
    $region14: #{tpu_custom_call.1} parent=1 // pred_check
      _
    $region15: #{tpu_custom_call.1} parent=1 // pred_check_branch
      %38 = sbr.rel (0) target = $region17
    $region16: #{tpu_custom_call.1} parent=1 // pred_region
      _
    $region17: #{tpu_custom_call.1} parent=1 // pred_fallthru
      _
    // Predicated region
    $region18: #{tpu_custom_call.1} parent=1 // pred_check
      _
    $region19: #{tpu_custom_call.1} parent=1 // pred_check_branch
      %40 = sbr.rel (0) target = $region21
    $region20: #{tpu_custom_call.1} parent=1 // pred_region
      %s42 = ssub.s32 128, 128
      %43 = vsyncadd [#allocation8], %s42
      %s45 = sshll.u32 [#allocation7], 4
      %s46 = int_to_ptr.vmem [resolvable:$true] %s45
      %48 = dma.hbm_to_vmem [thread:$0]  %s4, 128, %s46, [#allocation8]
    $region21: #{tpu_custom_call.1} parent=1 // pred_fallthru
      _
    // Predicated region
    $region22: #{tpu_custom_call.1} parent=1 // pred_check
      _
    $region23: #{tpu_custom_call.1} parent=1 // pred_check_branch
      %50 = sbr.rel (0) target = $region25
    $region24: #{tpu_custom_call.1} parent=1 // pred_region
      _
    $region25: #{tpu_custom_call.1} parent=1 // pred_fallthru
      _
    // Predicated region
    $region26: #{tpu_custom_call.1} parent=1 // pred_check
      _
    $region27: #{tpu_custom_call.1} parent=1 // pred_check_branch
      %52 = sbr.rel (0) target = $region29
    $region28: #{tpu_custom_call.1} parent=1 // pred_region
      %53 = dma.done [#allocation5], 16
    $region29: #{tpu_custom_call.1} parent=1 // pred_fallthru
      _
    // Predicated region
    $region30: #{tpu_custom_call.1} parent=1 // pred_check
      _
    $region31: #{tpu_custom_call.1} parent=1 // pred_check_branch
      %55 = sbr.rel (0) target = $region33
    $region32: #{tpu_custom_call.1} parent=1 // pred_region
      %56 = dma.done [#allocation3], 384
    $region33: #{tpu_custom_call.1} parent=1 // pred_fallthru
      _
    // Predicated region
    $region34: #{tpu_custom_call.1} parent=1 // pred_check
      _
    $region35: #{tpu_custom_call.1} parent=1 // pred_check_branch
      %58 = sbr.rel (0) target = $region37
    $region36: #{tpu_custom_call.1} parent=1 // pred_region
      %59 = dma.done [#allocation8], 128
    $region37: #{tpu_custom_call.1} parent=1 // pred_fallthru
      _
    %60 = sfence
    %v61 = vld [vmem:[#allocation6] sm:$0xff]
    %s62 = scalar_lea.vmem [#allocation6], 8
    %v63 = vld [vmem:[%s62] sm:$0xff]
    %s64 = scalar_lea.vmem [#allocation6], 16
    %v65 = vld [vmem:[%s64] sm:$0xff]
    %v66 = vld [vmem:[%s2] sm:$0x1]
    %s67 = scalar_lea.vmem %s2, 1
    %v68 = vld [vmem:[%s67] sm:$0x1]
    %s69 = scalar_lea.vmem %s2, 2
    %v70 = vld [vmem:[%s69] sm:$0x1]
    %v71 = vld [vmem:[%s3] sm:$0xff]
    %v72 = vld [vmem:[#allocation7] sm:$0xff]
    %v73 = vld [vmem:[%s5] sm:$0x1]
    %v75 = vlaneseq
    %v76 = vshrl.u32 %v75, 7
    %v77 = vsub.s32 0, %v76
    %v78 = vrot.slane %v66, %v77
    %v80 = vsub.f32 %v61, %v78
    %v82 = vlaneseq
    %v83 = vshrl.u32 %v82, 7
    %v84 = vsub.s32 0, %v83
    %v85 = vrot.slane %v68, %v84
    %v87 = vsub.f32 %v63, %v85
    %v89 = vlaneseq
    %v90 = vshrl.u32 %v89, 7
    %v91 = vsub.s32 0, %v90
    %v92 = vrot.slane %v70, %v91
    %v94 = vsub.f32 %v65, %v92
    %v95 = vmul.f32 %v80, %v80
    %v96 = vmul.f32 %v87, %v87
    %v97 = vadd.f32 %v95, %v96
    %v98 = vmul.f32 %v94, %v94
    %v99 = vadd.f32 %v97, %v98
    %v100 = vmax.f32 %v99, 1e-12
    %v101 = vrsqrt.pop %v100
    %v102 = vmul.f32 %v99, %v101
    %v104 = vlaneseq
    %v105 = vshrl.u32 %v104, 7
    %v106 = vsub.s32 0, %v105
    %v107 = vrot.slane %v73, %v106
    %v109 = vadd.f32 %v107, %v72
    %vm110 = vcmp.lt.f32.partialorder %v109, 0.5
    %v111 = vsel %vm110, 1, 0
    %v112 = vcvt.s32.f32 %v111
    %vm113 = vcmp.gt.f32.partialorder %v109, 1.5
    %v114 = vsel %vm113, 1, 0
    %v115 = vcvt.s32.f32 %v114
    %v116 = vsub.f32 1.0, %v112
    %v117 = vsub.f32 %v116, %v115
    %s118 = sld [smem:[#allocation2]]
    %v119 = vstv %s118
    %v120 = vmul.f32 %v112, %v119
    %s121 = sld [smem:[#allocation2 + $0x1]]
    %v122 = vstv %s121
    %v123 = vmul.f32 %v117, %v122
    %v124 = vadd.f32 %v120, %v123
    %s125 = sld [smem:[#allocation2 + $0x2]]
    %v126 = vstv %s125
    %v127 = vmul.f32 %v115, %v126
    %v128 = vadd.f32 %v124, %v127
    %s129 = sld [smem:[#allocation2 + $0x3]]
    %v130 = vstv %s129
    %v131 = vmul.f32 %v112, %v130
    %s132 = sld [smem:[#allocation2 + $0x4]]
    %v133 = vstv %s132
    %v134 = vmul.f32 %v117, %v133
    %v135 = vadd.f32 %v131, %v134
    %s136 = sld [smem:[#allocation2 + $0x5]]
    %v137 = vstv %s136
    %v138 = vmul.f32 %v115, %v137
    %v139 = vadd.f32 %v135, %v138
    %s140 = sld [smem:[#allocation2 + $0xc]]
    %v141 = vstv %s140
    %v142 = vmul.f32 %v112, %v141
    %s143 = sld [smem:[#allocation2 + $0xd]]
    %v144 = vstv %s143
    %v145 = vmul.f32 %v117, %v144
    %v146 = vadd.f32 %v142, %v145
    %s147 = sld [smem:[#allocation2 + $0xe]]
    %v148 = vstv %s147
    %v149 = vmul.f32 %v115, %v148
    %v150 = vadd.f32 %v146, %v149
    %s151 = sld [smem:[#allocation2 + $0xf]]
    %v152 = vstv %s151
    %v153 = vmul.f32 %v112, %v152
    %s154 = sld [smem:[#allocation2 + $0x10]]
    %v155 = vstv %s154
    %v156 = vmul.f32 %v117, %v155
    %v157 = vadd.f32 %v153, %v156
    %s158 = sld [smem:[#allocation2 + $0x11]]
    %v159 = vstv %s158
    %v160 = vmul.f32 %v115, %v159
    %v161 = vadd.f32 %v157, %v160
    %s162 = sld [smem:[#allocation2 + $0x12]]
    %v163 = vstv %s162
    %v164 = vmul.f32 %v112, %v163
    %s165 = sld [smem:[#allocation2 + $0x13]]
    %v166 = vstv %s165
    %v167 = vmul.f32 %v117, %v166
    %v168 = vadd.f32 %v164, %v167
    %s169 = sld [smem:[#allocation2 + $0x14]]
    %v170 = vstv %s169
    %v171 = vmul.f32 %v115, %v170
    %v172 = vadd.f32 %v168, %v171
    %v173 = vsub.f32 %v102, %v172
    %v174 = vmin.f32 %v173, -1e-06
    %v175 = vrcp.pop %v174
    %v176 = vmul.f32 %v150, %v101
    %v177 = vmul.f32 %v176, %v176
    %v178 = vmul.f32 %v177, %v177
    %v179 = vmul.f32 %v178, %v176
    %v180 = vmul.f32 %v139, %v179
    %v181 = vsub.f32 %v180, 1.0
    %v182 = vmul.f32 %v128, %v181
    %v183 = vmul.f32 %v150, %v175
    %v184 = vmul.f32 %v183, 1.442695
    %v185 = vpow.pop %v184
    %v186 = vmul.f32 %v182, %v185
    %v187 = vmul.f32 %v72, 2.0
    %v188 = vadd.f32 %v107, %v187
    %vm189 = vcmp.gt.f32.partialorder %v188, 1.5
    %s190 = sld [smem:[#allocation2 + $0x15]]
    %s191 = sld [smem:[#allocation2 + $0x16]]
    %v192 = vstv %s190
    %v193 = vstv %s191
    %v194 = vsel %vm189, %v192, %v193
    %s195 = sld [smem:[#allocation2 + $0x19]]
    %s196 = sld [smem:[#allocation2 + $0x1a]]
    %v197 = vstv %s195
    %v198 = vstv %s196
    %v199 = vsel %vm189, %v197, %v198
    %v200 = vmul.f32 %v199, %v199
    %s201 = sld [smem:[#allocation2 + $0x17]]
    %vm202 = vcmp.gt.f32.partialorder %v71, 0.5
    %vm203 = vcmp.ne.f32.partialorder %v72, %v107
    %vm204 = vmand %vm202, %vm203
    %v205 = vmul.f32 %v161, %v175
    %v206 = vmul.f32 %v205, 1.442695
    %v207 = vpow.pop %v206
    %v208 = vsel %vm204, %v207, 0.0
    %v209 = vmul.f32 %v194, %v208
    %v210 = vlaneseq
    %v211 = vshrl.u32 %v210, 7
    %v212 = vsub.s32 0, %v211
    %v213 = vrot.slane %v80, %v212
    %v214 = vmul.f32 %v80, %v213
    %v215 = vlaneseq
    %v216 = vshrl.u32 %v215, 7
    %v217 = vsub.s32 0, %v216
    %v218 = vrot.slane %v87, %v217
    %v219 = vmul.f32 %v87, %v218
    %v220 = vadd.f32 %v214, %v219
    %v221 = vlaneseq
    %v222 = vshrl.u32 %v221, 7
    %v223 = vsub.s32 0, %v222
    %v224 = vrot.slane %v94, %v223
    %v225 = vmul.f32 %v94, %v224
    %v226 = vadd.f32 %v220, %v225
    %v227 = vlaneseq
    %v228 = vshrl.u32 %v227, 7
    %v229 = vsub.s32 0, %v228
    %v230 = vrot.slane %v99, %v229
    %v231 = vadd.f32 %v99, %v230
    %v232 = vmul.f32 %v226, 2.0
    %v233 = vsub.f32 %v231, %v232
    %v234 = vlaneseq
    %v235 = vshrl.u32 %v234, 7
    %v236 = vsub.s32 0, %v235
    %v237 = vrot.slane %v101, %v236
    %v238 = vmul.f32 %v101, %v237
    %v239 = vmul.f32 %v226, %v238
    %v240 = vstv %s201
    %v241 = vsub.f32 %v239, %v240
    %v242 = vlaneseq
    %v243 = vshrl.u32 %v242, 7
    %v244 = vsub.s32 0, %v243
    %v245 = vrot.slane %v200, %v244
    %vm246 = vcmp.le.f32.partialorder %v233, %v245
    %v247 = vmul.f32 %v241, %v241
    %v248 = vmul.f32 %v208, %v247
    %v249 = vsel %vm246, %v248, 0.0
    %v250 = vrot.slane %v249, 4
    %v251 = vadd.f32 %v249, %v250
    %v252 = vrot.slane %v251, 2
    %v253 = vadd.f32 %v251, %v252
    %v254 = vrot.slane %v253, 1
    %v255 = vadd.f32 %v253, %v254
    %v256 = vmul.f32 %v209, %v255
    %v257 = vadd.f32 %v256, 0.0
    %v258 = vlaneseq
    %v259 = vshrl.u32 %v258, 7
    %v260 = vsub.s32 1, %v259
    %v261 = vrot.slane %v80, %v260
    %v262 = vmul.f32 %v80, %v261
    %v263 = vlaneseq
    %v264 = vshrl.u32 %v263, 7
    %v265 = vsub.s32 1, %v264
    %v266 = vrot.slane %v87, %v265
    %v267 = vmul.f32 %v87, %v266
    %v268 = vadd.f32 %v262, %v267
    %v269 = vlaneseq
    %v270 = vshrl.u32 %v269, 7
    %v271 = vsub.s32 1, %v270
    %v272 = vrot.slane %v94, %v271
    %v273 = vmul.f32 %v94, %v272
    %v274 = vadd.f32 %v268, %v273
    %v275 = vlaneseq
    %v276 = vshrl.u32 %v275, 7
    %v277 = vsub.s32 1, %v276
    %v278 = vrot.slane %v99, %v277
    %v279 = vadd.f32 %v99, %v278
    %v280 = vmul.f32 %v274, 2.0
    %v281 = vsub.f32 %v279, %v280
    %v282 = vlaneseq
    %v283 = vshrl.u32 %v282, 7
    %v284 = vsub.s32 1, %v283
    %v285 = vrot.slane %v101, %v284
    %v286 = vmul.f32 %v101, %v285
    %v287 = vmul.f32 %v274, %v286
    %v288 = vsub.f32 %v287, %v240
    %v289 = vlaneseq
    %v290 = vshrl.u32 %v289, 7
    %v291 = vsub.s32 1, %v290
    %v292 = vrot.slane %v200, %v291
    %vm293 = vcmp.le.f32.partialorder %v281, %v292
    %v294 = vmul.f32 %v288, %v288
    %v295 = vmul.f32 %v208, %v294
    %v296 = vsel %vm293, %v295, 0.0
    %v297 = vrot.slane %v296, 4
    %v298 = vadd.f32 %v296, %v297
    %v299 = vrot.slane %v298, 2
    %v300 = vadd.f32 %v298, %v299
    %v301 = vrot.slane %v300, 1
    %v302 = vadd.f32 %v300, %v301
    %v303 = vmul.f32 %v209, %v302
    %v305 = vrot.slane %v303, 1
    %v307 = vadd.f32 %v257, %v305
    %v308 = vlaneseq
    %v309 = vshrl.u32 %v308, 7
    %v310 = vsub.s32 2, %v309
    %v311 = vrot.slane %v80, %v310
    %v312 = vmul.f32 %v80, %v311
    %v313 = vlaneseq
    %v314 = vshrl.u32 %v313, 7
    %v315 = vsub.s32 2, %v314
    %v316 = vrot.slane %v87, %v315
    %v317 = vmul.f32 %v87, %v316
    %v318 = vadd.f32 %v312, %v317
    %v319 = vlaneseq
    %v320 = vshrl.u32 %v319, 7
    %v321 = vsub.s32 2, %v320
    %v322 = vrot.slane %v94, %v321
    %v323 = vmul.f32 %v94, %v322
    %v324 = vadd.f32 %v318, %v323
    %v325 = vlaneseq
    %v326 = vshrl.u32 %v325, 7
    %v327 = vsub.s32 2, %v326
    %v328 = vrot.slane %v99, %v327
    %v329 = vadd.f32 %v99, %v328
    %v330 = vmul.f32 %v324, 2.0
    %v331 = vsub.f32 %v329, %v330
    %v332 = vlaneseq
    %v333 = vshrl.u32 %v332, 7
    %v334 = vsub.s32 2, %v333
    %v335 = vrot.slane %v101, %v334
    %v336 = vmul.f32 %v101, %v335
    %v337 = vmul.f32 %v324, %v336
    %v338 = vsub.f32 %v337, %v240
    %v339 = vlaneseq
    %v340 = vshrl.u32 %v339, 7
    %v341 = vsub.s32 2, %v340
    %v342 = vrot.slane %v200, %v341
    %vm343 = vcmp.le.f32.partialorder %v331, %v342
    %v344 = vmul.f32 %v338, %v338
    %v345 = vmul.f32 %v208, %v344
    %v346 = vsel %vm343, %v345, 0.0
    %v347 = vrot.slane %v346, 4
    %v348 = vadd.f32 %v346, %v347
    %v349 = vrot.slane %v348, 2
    %v350 = vadd.f32 %v348, %v349
    %v351 = vrot.slane %v350, 1
    %v352 = vadd.f32 %v350, %v351
    %v353 = vmul.f32 %v209, %v352
    %v355 = vrot.slane %v353, 2
    %v357 = vadd.f32 %v307, %v355
    %v358 = vlaneseq
    %v359 = vshrl.u32 %v358, 7
    %v360 = vsub.s32 3, %v359
    %v361 = vrot.slane %v80, %v360
    %v362 = vmul.f32 %v80, %v361
    %v363 = vlaneseq
    %v364 = vshrl.u32 %v363, 7
    %v365 = vsub.s32 3, %v364
    %v366 = vrot.slane %v87, %v365
    %v367 = vmul.f32 %v87, %v366
    %v368 = vadd.f32 %v362, %v367
    %v369 = vlaneseq
    %v370 = vshrl.u32 %v369, 7
    %v371 = vsub.s32 3, %v370
    %v372 = vrot.slane %v94, %v371
    %v373 = vmul.f32 %v94, %v372
    %v374 = vadd.f32 %v368, %v373
    %v375 = vlaneseq
    %v376 = vshrl.u32 %v375, 7
    %v377 = vsub.s32 3, %v376
    %v378 = vrot.slane %v99, %v377
    %v379 = vadd.f32 %v99, %v378
    %v380 = vmul.f32 %v374, 2.0
    %v381 = vsub.f32 %v379, %v380
    %v382 = vlaneseq
    %v383 = vshrl.u32 %v382, 7
    %v384 = vsub.s32 3, %v383
    %v385 = vrot.slane %v101, %v384
    %v386 = vmul.f32 %v101, %v385
    %v387 = vmul.f32 %v374, %v386
    %v388 = vsub.f32 %v387, %v240
    %v389 = vlaneseq
    %v390 = vshrl.u32 %v389, 7
    %v391 = vsub.s32 3, %v390
    %v392 = vrot.slane %v200, %v391
    %vm393 = vcmp.le.f32.partialorder %v381, %v392
    %v394 = vmul.f32 %v388, %v388
    %v395 = vmul.f32 %v208, %v394
    %v396 = vsel %vm393, %v395, 0.0
    %v397 = vrot.slane %v396, 4
    %v398 = vadd.f32 %v396, %v397
    %v399 = vrot.slane %v398, 2
    %v400 = vadd.f32 %v398, %v399
    %v401 = vrot.slane %v400, 1
    %v402 = vadd.f32 %v400, %v401
    %v403 = vmul.f32 %v209, %v402
    %v405 = vrot.slane %v403, 3
    %v407 = vadd.f32 %v357, %v405
    %v408 = vlaneseq
    %v409 = vshrl.u32 %v408, 7
    %v410 = vsub.s32 4, %v409
    %v411 = vrot.slane %v80, %v410
    %v412 = vmul.f32 %v80, %v411
    %v413 = vlaneseq
    %v414 = vshrl.u32 %v413, 7
    %v415 = vsub.s32 4, %v414
    %v416 = vrot.slane %v87, %v415
    %v417 = vmul.f32 %v87, %v416
    %v418 = vadd.f32 %v412, %v417
    %v419 = vlaneseq
    %v420 = vshrl.u32 %v419, 7
    %v421 = vsub.s32 4, %v420
    %v422 = vrot.slane %v94, %v421
    %v423 = vmul.f32 %v94, %v422
    %v424 = vadd.f32 %v418, %v423
    %v425 = vlaneseq
    %v426 = vshrl.u32 %v425, 7
    %v427 = vsub.s32 4, %v426
    %v428 = vrot.slane %v99, %v427
    %v429 = vadd.f32 %v99, %v428
    %v430 = vmul.f32 %v424, 2.0
    %v431 = vsub.f32 %v429, %v430
    %v432 = vlaneseq
    %v433 = vshrl.u32 %v432, 7
    %v434 = vsub.s32 4, %v433
    %v435 = vrot.slane %v101, %v434
    %v436 = vmul.f32 %v101, %v435
    %v437 = vmul.f32 %v424, %v436
    %v438 = vsub.f32 %v437, %v240
    %v439 = vlaneseq
    %v440 = vshrl.u32 %v439, 7
    %v441 = vsub.s32 4, %v440
    %v442 = vrot.slane %v200, %v441
    %vm443 = vcmp.le.f32.partialorder %v431, %v442
    %v444 = vmul.f32 %v438, %v438
    %v445 = vmul.f32 %v208, %v444
    %v446 = vsel %vm443, %v445, 0.0
    %v447 = vrot.slane %v446, 4
    %v448 = vadd.f32 %v446, %v447
    %v449 = vrot.slane %v448, 2
    %v450 = vadd.f32 %v448, %v449
    %v451 = vrot.slane %v450, 1
    %v452 = vadd.f32 %v450, %v451
    %v453 = vmul.f32 %v209, %v452
    %v455 = vrot.slane %v453, 4
    %v457 = vadd.f32 %v407, %v455
    %v458 = vlaneseq
    %v459 = vshrl.u32 %v458, 7
    %v460 = vsub.s32 5, %v459
    %v461 = vrot.slane %v80, %v460
    %v462 = vmul.f32 %v80, %v461
    %v463 = vlaneseq
    %v464 = vshrl.u32 %v463, 7
    %v465 = vsub.s32 5, %v464
    %v466 = vrot.slane %v87, %v465
    %v467 = vmul.f32 %v87, %v466
    %v468 = vadd.f32 %v462, %v467
    %v469 = vlaneseq
    %v470 = vshrl.u32 %v469, 7
    %v471 = vsub.s32 5, %v470
    %v472 = vrot.slane %v94, %v471
    %v473 = vmul.f32 %v94, %v472
    %v474 = vadd.f32 %v468, %v473
    %v475 = vlaneseq
    %v476 = vshrl.u32 %v475, 7
    %v477 = vsub.s32 5, %v476
    %v478 = vrot.slane %v99, %v477
    %v479 = vadd.f32 %v99, %v478
    %v480 = vmul.f32 %v474, 2.0
    %v481 = vsub.f32 %v479, %v480
    %v482 = vlaneseq
    %v483 = vshrl.u32 %v482, 7
    %v484 = vsub.s32 5, %v483
    %v485 = vrot.slane %v101, %v484
    %v486 = vmul.f32 %v101, %v485
    %v487 = vmul.f32 %v474, %v486
    %v488 = vsub.f32 %v487, %v240
    %v489 = vlaneseq
    %v490 = vshrl.u32 %v489, 7
    %v491 = vsub.s32 5, %v490
    %v492 = vrot.slane %v200, %v491
    %vm493 = vcmp.le.f32.partialorder %v481, %v492
    %v494 = vmul.f32 %v488, %v488
    %v495 = vmul.f32 %v208, %v494
    %v496 = vsel %vm493, %v495, 0.0
    %v497 = vrot.slane %v496, 4
    %v498 = vadd.f32 %v496, %v497
    %v499 = vrot.slane %v498, 2
    %v500 = vadd.f32 %v498, %v499
    %v501 = vrot.slane %v500, 1
    %v502 = vadd.f32 %v500, %v501
    %v503 = vmul.f32 %v209, %v502
    %v505 = vrot.slane %v503, 5
    %v507 = vadd.f32 %v457, %v505
    %v508 = vlaneseq
    %v509 = vshrl.u32 %v508, 7
    %v510 = vsub.s32 6, %v509
    %v511 = vrot.slane %v80, %v510
    %v512 = vmul.f32 %v80, %v511
    %v513 = vlaneseq
    %v514 = vshrl.u32 %v513, 7
    %v515 = vsub.s32 6, %v514
    %v516 = vrot.slane %v87, %v515
    %v517 = vmul.f32 %v87, %v516
    %v518 = vadd.f32 %v512, %v517
    %v519 = vlaneseq
    %v520 = vshrl.u32 %v519, 7
    %v521 = vsub.s32 6, %v520
    %v522 = vrot.slane %v94, %v521
    %v523 = vmul.f32 %v94, %v522
    %v524 = vadd.f32 %v518, %v523
    %v525 = vlaneseq
    %v526 = vshrl.u32 %v525, 7
    %v527 = vsub.s32 6, %v526
    %v528 = vrot.slane %v99, %v527
    %v529 = vadd.f32 %v99, %v528
    %v530 = vmul.f32 %v524, 2.0
    %v531 = vsub.f32 %v529, %v530
    %v532 = vlaneseq
    %v533 = vshrl.u32 %v532, 7
    %v534 = vsub.s32 6, %v533
    %v535 = vrot.slane %v101, %v534
    %v536 = vmul.f32 %v101, %v535
    %v537 = vmul.f32 %v524, %v536
    %v538 = vsub.f32 %v537, %v240
    %v539 = vlaneseq
    %v540 = vshrl.u32 %v539, 7
    %v541 = vsub.s32 6, %v540
    %v542 = vrot.slane %v200, %v541
    %vm543 = vcmp.le.f32.partialorder %v531, %v542
    %v544 = vmul.f32 %v538, %v538
    %v545 = vmul.f32 %v208, %v544
    %v546 = vsel %vm543, %v545, 0.0
    %v547 = vrot.slane %v546, 4
    %v548 = vadd.f32 %v546, %v547
    %v549 = vrot.slane %v548, 2
    %v550 = vadd.f32 %v548, %v549
    %v551 = vrot.slane %v550, 1
    %v552 = vadd.f32 %v550, %v551
    %v553 = vmul.f32 %v209, %v552
    %v555 = vrot.slane %v553, 6
    %v557 = vadd.f32 %v507, %v555
    %v558 = vlaneseq
    %v559 = vshrl.u32 %v558, 7
    %v560 = vsub.s32 7, %v559
    %v561 = vrot.slane %v80, %v560
    %v562 = vmul.f32 %v80, %v561
    %v563 = vlaneseq
    %v564 = vshrl.u32 %v563, 7
    %v565 = vsub.s32 7, %v564
    %v566 = vrot.slane %v87, %v565
    %v567 = vmul.f32 %v87, %v566
    %v568 = vadd.f32 %v562, %v567
    %v569 = vlaneseq
    %v570 = vshrl.u32 %v569, 7
    %v571 = vsub.s32 7, %v570
    %v572 = vrot.slane %v94, %v571
    %v573 = vmul.f32 %v94, %v572
    %v574 = vadd.f32 %v568, %v573
    %v575 = vlaneseq
    %v576 = vshrl.u32 %v575, 7
    %v577 = vsub.s32 7, %v576
    %v578 = vrot.slane %v99, %v577
    %v579 = vadd.f32 %v99, %v578
    %v580 = vmul.f32 %v574, 2.0
    %v581 = vsub.f32 %v579, %v580
    %v582 = vlaneseq
    %v583 = vshrl.u32 %v582, 7
    %v584 = vsub.s32 7, %v583
    %v585 = vrot.slane %v101, %v584
    %v586 = vmul.f32 %v101, %v585
    %v587 = vmul.f32 %v574, %v586
    %v588 = vsub.f32 %v587, %v240
    %v589 = vlaneseq
    %v590 = vshrl.u32 %v589, 7
    %v591 = vsub.s32 7, %v590
    %v592 = vrot.slane %v200, %v591
    %vm593 = vcmp.le.f32.partialorder %v581, %v592
    %v594 = vmul.f32 %v588, %v588
    %v595 = vmul.f32 %v208, %v594
    %v596 = vsel %vm593, %v595, 0.0
    %v597 = vrot.slane %v596, 4
    %v598 = vadd.f32 %v596, %v597
    %v599 = vrot.slane %v598, 2
    %v600 = vadd.f32 %v598, %v599
    %v601 = vrot.slane %v600, 1
    %v602 = vadd.f32 %v600, %v601
    %v603 = vmul.f32 %v209, %v602
    %v605 = vrot.slane %v603, 7
    %v607 = vadd.f32 %v557, %v605
    %s608 = ssub.f32 1.0, %s201
    %v609 = vmul.f32 %v209, %v208
    %s610 = smul.f32 %s608, %s608
    %v611 = vstv %s610
    %v612 = vmul.f32 %v609, %v611
    %v613 = vrot.slane %v612, 4
    %v614 = vadd.f32 %v612, %v613
    %v615 = vrot.slane %v614, 2
    %v616 = vadd.f32 %v614, %v615
    %v617 = vrot.slane %v616, 1
    %v618 = vadd.f32 %v616, %v617
    %v619 = vsub.f32 %v607, %v618
    %v620 = vmul.f32 %v619, 0.5
    %v621 = vrot.slane %v186, 4
    %v622 = vadd.f32 %v186, %v621
    %v623 = vrot.slane %v622, 2
    %v624 = vadd.f32 %v622, %v623
    %v625 = vrot.slane %v624, 1
    %v626 = vadd.f32 %v624, %v625
    %v627 = vmul.f32 %v626, 0.5
    %v628 = vadd.f32 %v627, %v620
    %629 = vst [vmem:[#allocation9] sm:$0x1] %v628
    // Predicated region
    $region38: #{tpu_custom_call.1} parent=1 // pred_check
      _
    $region39: #{tpu_custom_call.1} parent=1 // pred_check_branch
      %631 = sbr.rel (0) target = $region41
    $region40: #{tpu_custom_call.1} parent=1 // pred_region
      %s633 = ssub.s32 16, 16
      %634 = vsyncadd [#allocation4], %s633
      %s636 = sshll.u32 [#allocation9], 4
      %s637 = int_to_ptr.vmem [resolvable:$true] %s636
      %639 = dma.vmem_to_hbm [thread:$0]  %s637, 16, %s6, [#allocation4]
    $region41: #{tpu_custom_call.1} parent=1 // pred_fallthru
      _
    // Predicated region
    $region42: #{tpu_custom_call.1} parent=1 // pred_check
      _
    $region43: #{tpu_custom_call.1} parent=1 // pred_check_branch
      %641 = sbr.rel (0) target = $region45
    $region44: #{tpu_custom_call.1} parent=1 // pred_region
      %642 = dma.done [#allocation4], 16
    $region45: #{tpu_custom_call.1} parent=1 // pred_fallthru
      _
    %643 = vsyncpa [#allocation3], 1
    %644 = vsyncpa [#allocation8], 1
    %645 = vsyncpa [#allocation4], 1
    %646 = vsyncpa [#allocation5], 1

</llo_original>
